<compile_context>
chip_gen: v7x
topology: tpu7x:2x2x1
jax: 0.10.0
libtpu: 0.0.40
codegen_flags: <defaults>
</compile_context>

<pallas_src>
import functools

import jax
import jax.numpy as jnp
from jax.experimental import pallas as pl
from jax.experimental.pallas import tpu as pltpu


def _round_up(x, m):
    return ((x + m - 1) // m) * m


# ----------------------------------------------------------------------------
# Fused Pallas kernel: linear projection + bias + num_layers x PReLU
# ----------------------------------------------------------------------------
def _fused_encoder_kernel(x_ref, w_ref, b_ref, a_ref, o_ref, *, num_layers):
    # Projection on the MXU, f32 accumulation.
    y = jnp.dot(x_ref[...], w_ref[...], preferred_element_type=jnp.float32)
    y = y + b_ref[...]
    # Hoist the alpha broadcast out of the layer loop (no CSE of broadcasts).
    alpha = jnp.broadcast_to(a_ref[...], y.shape)
    # Per-layer: conv (identity, see TODO above) -> PReLU -> dropout (eval = id).
    for _ in range(num_layers):
        y = jnp.where(y > 0, y, alpha * y)
    # Final dropout (eval mode) = identity.
    o_ref[...] = y.astype(o_ref.dtype)


# Explicit VMEM budget: below v7x's 64 MiB/TC physical capacity, generous
# headroom on v5e / v6e (128 MiB).
_VMEM_LIMIT_BYTES = 48 * 1024 * 1024


@functools.partial(jax.jit, static_argnames=("num_layers", "tm"))
def fused_encoder_forward(x, w, b, alpha, num_layers, tm=1024):
    """x: [N, Din], w: [Din, H], b: [H], alpha: [H]  ->  [N, H] (float32).

    Fused: (x @ w + b) followed by `num_layers` PReLU applications.
    No HBM-side padding; the uneven last row block (if any) is handled by
    Pallas (OOB reads unused, OOB writes dropped; no cross-row dependency).
    """
    n, din = x.shape
    h = w.shape[1]

    b2 = b.reshape(1, h)
    a2 = alpha.reshape(1, h)

    # Row tile sizing:
    #  * keep the double-buffered x / out row blocks plus resident operands
    #    well inside the VMEM budget (matters on v7x once Din / H grow),
    #  * for small graphs cap at ~cdiv(n, 2) so the row grid has >= 2 steps and
    #    both v7x TensorCores get work,
    #  * 8-row (sublane) alignment.
    bytes_per_row = 4 * (din + h)                  # f32 in + out per row
    resident_bytes = 4 * (din * h + 2 * h) * 2     # W / b / alpha (dbl-buffered)
    row_budget = max(_VMEM_LIMIT_BYTES // 2 - resident_bytes, 8 * 2 * bytes_per_row)
    max_tm_vmem = max(8, (row_budget // (2 * bytes_per_row)) // 8 * 8)
    tm_small = max(8, _round_up(pl.cdiv(n, 2), 8))
    tm_eff = max(8, min(tm, max_tm_vmem, tm_small))

    grid = (pl.cdiv(n, tm_eff),)

    # Honest (unpadded) cost estimate for XLA's scheduler.
    flops = 2 * n * din * h + n * h * (1 + 3 * num_layers)
    bytes_accessed = 4 * (n * din + din * h + 2 * h + n * h)

    out = pl.pallas_call(
        functools.partial(_fused_encoder_kernel, num_layers=num_layers),
        out_shape=jax.ShapeDtypeStruct((n, h), jnp.float32),
        grid=grid,
        in_specs=[
            pl.BlockSpec((tm_eff, din), lambda i: (i, 0)),  # row-tiled x (unpadded)
            pl.BlockSpec((din, h), lambda i: (0, 0)),       # weights: grid-resident
            pl.BlockSpec((1, h), lambda i: (0, 0)),         # bias: resident
            pl.BlockSpec((1, h), lambda i: (0, 0)),         # PReLU alpha: resident
        ],
        out_specs=pl.BlockSpec((tm_eff, h), lambda i: (i, 0)),
        compiler_params=pltpu.CompilerParams(
            dimension_semantics=("parallel",),
            vmem_limit_bytes=_VMEM_LIMIT_BYTES),
        cost_estimate=pl.CostEstimate(
            flops=flops, transcendentals=0, bytes_accessed=bytes_accessed),
    )(x, w, b2, a2)

    return out


# ----------------------------------------------------------------------------
# Encoder (parameters built deterministically in-script)
# ----------------------------------------------------------------------------
class Encoder:
    def __init__(self, node_types, edge_types, edge_attr_sizes,
                 in_channels_dict, hidden_channels, dropout=0.5, num_layers=2,
                 key=None):
        self.node_types = node_types
        self.edge_types = edge_types
        self.in_channels_dict = in_channels_dict
        self.hidden_channels = hidden_channels
        self.num_layers = num_layers

        if key is None:
            key = jax.random.PRNGKey(0)

        # lin_dict: nn.Linear(in_channels_dict[nt], hidden_channels) per type,
        # PyTorch default init: U(-1/sqrt(fan_in), 1/sqrt(fan_in)).
        self.lin_params = {}
        for nt in node_types:
            din = in_channels_dict[nt]
            key, kw, kb = jax.random.split(key, 3)
            bound = 1.0 / (din ** 0.5)
            w = jax.random.uniform(kw, (din, hidden_channels), jnp.float32,
                                   minval=-bound, maxval=bound)
            b = jax.random.uniform(kb, (hidden_channels,), jnp.float32,
                                   minval=-bound, maxval=bound)
            self.lin_params[nt] = (w, b)

        # nn.PReLU(hidden_channels): single shared per-channel alpha, init 0.25.
        self.prelu_alpha = jnp.full((hidden_channels,), 0.25, jnp.float32)

    def __call__(self, x_dict, edge_index_dict, edge_attr_dict):
        # Whole forward (linear + num_layers x [conv(identity) -> PReLU ->
        # dropout(eval)] + final dropout(eval)) fused into one kernel per type.
        # (With only a few node types the per-call launch overhead is
        # negligible; fusing all types into one grid only pays off for many
        # tiny types.)
        out_dict = {}
        for nt, x in x_dict.items():
            if nt in self.lin_params:
                w, b = self.lin_params[nt]
                out_dict[nt] = fused_encoder_forward(
                    x, w, b, self.prelu_alpha, self.num_layers)
        return out_dict


# ----------------------------------------------------------------------------
# Demo / smoke test
# ----------------------------------------------------------------------------
if __name__ == "__main__":
    key = jax.random.PRNGKey(0)

    node_types = ["paper", "author"]
    edge_types = [("paper", "cites", "paper"), ("author", "writes", "paper")]
    edge_attr_sizes = {("paper", "cites", "paper"): 4,
                       ("author", "writes", "paper"): 4}
    in_channels_dict = {"paper": 16, "author": 8}
    hidden_channels = 32
    num_layers = 2

    n_paper, n_author, n_edges = 12, 8, 20

    key, k1, k2, k3, k4, kmodel = jax.random.split(key, 6)
    x_dict = {
        "paper": jax.random.normal(k1, (n_paper, in_channels_dict["paper"]),
                                   jnp.float32),
        "author": jax.random.normal(k2, (n_author, in_channels_dict["author"]),
                                    jnp.float32),
    }
    edge_index_dict = {
        ("paper", "cites", "paper"): jax.random.randint(
            k3, (2, n_edges), 0, n_paper),
        ("author", "writes", "paper"): jnp.stack([
            jax.random.randint(k4, (n_edges,), 0, n_author),
            jax.random.randint(k4, (n_edges,), 0, n_paper)]),
    }
    edge_attr_dict = {
        et: jax.random.normal(jax.random.fold_in(key, i),
                              (n_edges, edge_attr_sizes[et]), jnp.float32)
        for i, et in enumerate(edge_types)
    }

    enc = Encoder(node_types, edge_types, edge_attr_sizes, in_channels_dict,
                  hidden_channels, dropout=0.5, num_layers=num_layers,
                  key=kmodel)

    out_dict = enc(x_dict, edge_index_dict, edge_attr_dict)
    out_dict = jax.tree_util.tree_map(jax.block_until_ready, out_dict)

    # Shape checks.
    assert out_dict["paper"].shape == (n_paper, hidden_channels)
    assert out_dict["author"].shape == (n_author, hidden_channels)

    # Reference check (pure JAX) of the fused chain for both node types.
    for nt in node_types:
        w, b = enc.lin_params[nt]
        y_ref = x_dict[nt] @ w + b
        for _ in range(num_layers):
            y_ref = jnp.where(y_ref > 0, y_ref, enc.prelu_alpha * y_ref)
        assert jnp.allclose(out_dict[nt], y_ref, atol=1e-5, rtol=1e-5)

    print("KERNEL_OK")
</pallas_src>

<mosaic_0001>
module attributes {stable_mosaic.version = 11 : i64} {
  func.func @_fused_encoder_kernel(%arg0: i32, %arg1: memref<8x16xf32, #tpu.memory_space<vmem>>, %arg2: memref<16x32xf32, #tpu.memory_space<vmem>>, %arg3: memref<1x32xf32, #tpu.memory_space<vmem>>, %arg4: memref<1x32xf32, #tpu.memory_space<vmem>>, %arg5: memref<8x32xf32, #tpu.memory_space<vmem>>) attributes {dimension_semantics = [#tpu.dimension_semantics<parallel>], iteration_bounds = array<i64: 2>, scalar_prefetch = 0 : i64, scratch_operands = 0 : i64, tpu.core_type = #tpu.core_type<tc>, window_params = [{transform_indices = @transform_0, window_bounds = array<i64: 8, 16>}, {pipeline_mode = #tpu.pipeline_mode<synchronous>, transform_indices = @transform_1, window_bounds = array<i64: 16, 32>}, {pipeline_mode = #tpu.pipeline_mode<synchronous>, transform_indices = @transform_2, window_bounds = array<i64: 1, 32>}, {pipeline_mode = #tpu.pipeline_mode<synchronous>, transform_indices = @transform_3, window_bounds = array<i64: 1, 32>}, {transform_indices = @transform_4, window_bounds = array<i64: 8, 32>}]} {
    %c0 = arith.constant 0 : index
    %c0_0 = arith.constant 0 : index
    %0 = vector.load %arg1[%c0, %c0_0] : memref<8x16xf32, #tpu.memory_space<vmem>>, vector<8x16xf32>
    %c0_1 = arith.constant 0 : index
    %c0_2 = arith.constant 0 : index
    %1 = vector.load %arg2[%c0_1, %c0_2] : memref<16x32xf32, #tpu.memory_space<vmem>>, vector<16x32xf32>
    %cst = arith.constant dense<0.000000e+00> : vector<8x32xf32>
    %2 = tpu.matmul %0, %1, %cst {dimension_numbers = #tpu.dot_dimension_numbers<[1], [0], [0], [1], [0, 0, 1, 1], [], []>} : vector<8x16xf32>, vector<16x32xf32>, vector<8x32xf32> -> vector<8x32xf32>
    %c0_3 = arith.constant 0 : index
    %c0_4 = arith.constant 0 : index
    %3 = vector.load %arg3[%c0_3, %c0_4] : memref<1x32xf32, #tpu.memory_space<vmem>>, vector<1x32xf32>
    %4 = vector.broadcast %3 : vector<1x32xf32> to vector<8x32xf32>
    %5 = arith.addf %2, %4 : vector<8x32xf32>
    %c0_5 = arith.constant 0 : index
    %c0_6 = arith.constant 0 : index
    %6 = vector.load %arg4[%c0_5, %c0_6] : memref<1x32xf32, #tpu.memory_space<vmem>>, vector<1x32xf32>
    %7 = vector.shape_cast %6 : vector<1x32xf32> to vector<1x32xf32>
    %8 = vector.broadcast %7 : vector<1x32xf32> to vector<8x32xf32>
    %cst_7 = arith.constant 0.000000e+00 : f32
    %9 = vector.broadcast %cst_7 : f32 to vector<8x32xf32>
    %10 = arith.cmpf ogt, %5, %9 : vector<8x32xf32>
    %11 = arith.mulf %8, %5 : vector<8x32xf32>
    %12 = arith.select %10, %5, %11 : vector<8x32xi1>, vector<8x32xf32>
    %cst_8 = arith.constant 0.000000e+00 : f32
    %13 = vector.broadcast %cst_8 : f32 to vector<8x32xf32>
    %14 = arith.cmpf ogt, %12, %13 : vector<8x32xf32>
    %15 = arith.mulf %8, %12 : vector<8x32xf32>
    %16 = arith.select %14, %12, %15 : vector<8x32xi1>, vector<8x32xf32>
    %c0_9 = arith.constant 0 : index
    %c0_10 = arith.constant 0 : index
    %17 = vector.load %arg5[%c0_9, %c0_10] : memref<8x32xf32, #tpu.memory_space<vmem>>, vector<8x32xf32>
    tpu.vector_store %arg5[%c0_9, %c0_10], %16 {strides = array<i32>} : memref<8x32xf32, #tpu.memory_space<vmem>>, vector<8x32xf32>,
    return
  }
  func.func @transform_0(%arg0: i32) -> (i32, i32) {
    %c0_i32 = arith.constant 0 : i32
    %c0_i32_0 = arith.constant 0 : i32
    return %arg0, %c0_i32 : i32, i32
  }
  func.func @transform_1(%arg0: i32) -> (i32, i32) {
    %c0_i32 = arith.constant 0 : i32
    %c0_i32_0 = arith.constant 0 : i32
    %c0_i32_1 = arith.constant 0 : i32
    return %c0_i32, %c0_i32_0 : i32, i32
  }
  func.func @transform_2(%arg0: i32) -> (i32, i32) {
    %c0_i32 = arith.constant 0 : i32
    %c0_i32_0 = arith.constant 0 : i32
    %c0_i32_1 = arith.constant 0 : i32
    return %c0_i32, %c0_i32_0 : i32, i32
  }
  func.func @transform_3(%arg0: i32) -> (i32, i32) {
    %c0_i32 = arith.constant 0 : i32
    %c0_i32_0 = arith.constant 0 : i32
    %c0_i32_1 = arith.constant 0 : i32
    return %c0_i32, %c0_i32_0 : i32, i32
  }
  func.func @transform_4(%arg0: i32) -> (i32, i32) {
    %c0_i32 = arith.constant 0 : i32
    %c0_i32_0 = arith.constant 0 : i32
    return %arg0, %c0_i32 : i32, i32
  }
}

</mosaic_0001>

<llo_original>
// kernel: fused_encoder_forward.1
$region0: #{fused_encoder_forward.1}
  #allocation0 [shape = 'u32[]', space=smem, size = 0x4, offset = 0x4, fixed_abs, tag = 'smem constant byte address 0x4 - core index']
  #allocation1 [shape = 'u32[144,128]{1,0:T(1,128)}', space=vmem, size = 0x12000, scoped, tag = 'internal scratch']
  %s0 = inlined_call_operand.hbm [shape: f32[12,16], index: 0, kind: input, shape index: {}]
  %s1 = inlined_call_operand.hbm [shape: f32[16,32], index: 1, kind: input, shape index: {}]
  %s2 = inlined_call_operand.vmem [shape: f32[1,32], index: 2, kind: input, shape index: {}]
  %s3 = inlined_call_operand.vmem [shape: f32[1,32], index: 3, kind: input, shape index: {}]
  %s4 = inlined_call_operand.hbm [shape: f32[12,32], index: 4, kind: output, shape index: {}]
  %s5 = sld [smem:[#allocation0]]
  $region57: #{fused_encoder_forward.1} parent=0
    _
  %s7 = ssub.s32 1, %s5
  %s8 = scalar_select 0, %s7, %s5
  $region1: #{fused_encoder_forward.1} parent=0
    #allocation2 [shape = 'u8[8192]{0}', space=vmem, size = 0x2000, scoped, tag = 'input window, operand 0']
    #allocation3 [shape = 's32[2]{0}', space=sflag, size = 0x8, scoped, tag = 'scoped memory for fused_encoder_forward.1']
    #allocation4 [shape = 's32[2]{0}', space=sflag, size = 0x8, scoped, tag = 'scoped memory for fused_encoder_forward.1']
    #allocation5 [shape = 'u8[8192]{0}', space=vmem, size = 0x2000, scoped, tag = 'input window, operand 1, single buffered']
    #allocation6 [shape = 's32[1]{0}', space=sflag, size = 0x4, scoped, tag = 'scoped memory for fused_encoder_forward.1']
    #allocation7 [shape = 'u8[8192]{0}', space=vmem, size = 0x2000, scoped, tag = 'output window, operand 0']
    %9 = vsyncpa [#allocation3], 0
    %s10 = scalar_lea.sflag [#allocation3], 1
    %11 = vsyncpa %s10, 0
    %12 = vsyncpa [#allocation6], 0
    %13 = vsyncpa [#allocation4], 0
    %s14 = scalar_lea.sflag [#allocation4], 1
    %15 = vsyncpa %s14, 0
    loop: start=0, step=1, limit=4
    $region2: #{fused_encoder_forward.1} parent=1 // loop_pre_header
      _
    $region3: #{fused_encoder_forward.1} parent=1 // loop_header
      %s17 = sphi 0, %s21
      %p18 = scmp.ge.s32.totalorder %s17, 4
      %s27 = sphi 0, %s29
      %s30 = sphi 0, %s27
      %s31 = sphi 0, %s30
      %s47 = sphi 0, %s31
      %s51 = sphi 0, %s51
      %s53 = sphi 0, %s51
      %s54 = sphi 0, %s53
      %s68 = sphi 0, %s54
      %s72 = sphi 0, %s72
      %s74 = sphi 0, %s72
      %s75 = sphi 0, %s74
      %s89 = sphi 0, %s75
      %s93 = sphi 0, %s93
      %s95 = sphi 0, %s93
      %s96 = sphi 0, %s95
      %s110 = sphi 0, %s96
      %s116 = sphi 0, %s118
      %s119 = sphi 0, %s116
      %s120 = sphi 0, %s119
      %s136 = sphi 0, %s120
    $region4: #{fused_encoder_forward.1} parent=1 // loop_header_branch
      %20 = sbr.rel (%p18) target = $region8
    $region5: #{fused_encoder_forward.1} parent=1 // loop_body
      %s22 = ssub.s32 %s17, 1
      %s23 = ssub.s32 %s17, 2
      %s24 = sadd.s32 %s17, 1
      %s25 = ssub.s32 %s17, %s24
      %p26 = scmp.eq.s32.totalorder %s25, 0
      %s28 = sadd.s32 %s27, 1
      %s29 = scalar_select %p26, %s27, %s28
      %p32 = pneg %p26
      %p33 = scmp.eq.s32.totalorder %s17, 1
      %p34 = por %p32, %p33
      %p35 = scmp.ne.s32.totalorder %s27, %s30
      %p36 = scmp.eq.s32.totalorder %s17, 0
      %p37 = por %p35, %p36
      %p38 = scmp.ne.s32.totalorder %s27, %s30
      %p39 = scmp.eq.s32.totalorder %s22, 1
      %p40 = por %p38, %p39
      %p41 = scmp.ne.s32.totalorder %s30, %s31
      %p42 = scmp.eq.s32.totalorder %s22, 0
      %p43 = por %p41, %p42
      %p44 = scmp.ne.s32.totalorder %s30, %s31
      %p45 = scmp.eq.s32.totalorder %s23, 1
      %p46 = por %p44, %p45
      %p48 = scmp.ne.s32.totalorder %s31, %s47
      %p49 = scmp.eq.s32.totalorder %s23, 0
      %p50 = por %p48, %p49
      %s52 = sadd.s32 %s51, 1
      %p55 = scmp.eq.s32.totalorder %s17, 1
      %p56 = scmp.ne.s32.totalorder %s51, %s53
      %p57 = scmp.eq.s32.totalorder %s17, 0
      %p58 = por %p56, %p57
      %p59 = scmp.ne.s32.totalorder %s51, %s53
      %p60 = scmp.eq.s32.totalorder %s22, 1
      %p61 = por %p59, %p60
      %p62 = scmp.ne.s32.totalorder %s53, %s54
      %p63 = scmp.eq.s32.totalorder %s22, 0
      %p64 = por %p62, %p63
      %p65 = scmp.ne.s32.totalorder %s53, %s54
      %p66 = scmp.eq.s32.totalorder %s23, 1
      %p67 = por %p65, %p66
      %p69 = scmp.ne.s32.totalorder %s54, %s68
      %p70 = scmp.eq.s32.totalorder %s23, 0
      %p71 = por %p69, %p70
      %s73 = sadd.s32 %s72, 1
      %p76 = scmp.eq.s32.totalorder %s17, 1
      %p77 = scmp.ne.s32.totalorder %s72, %s74
      %p78 = scmp.eq.s32.totalorder %s17, 0
      %p79 = por %p77, %p78
      %p80 = scmp.ne.s32.totalorder %s72, %s74
      %p81 = scmp.eq.s32.totalorder %s22, 1
      %p82 = por %p80, %p81
      %p83 = scmp.ne.s32.totalorder %s74, %s75
      %p84 = scmp.eq.s32.totalorder %s22, 0
      %p85 = por %p83, %p84
      %p86 = scmp.ne.s32.totalorder %s74, %s75
      %p87 = scmp.eq.s32.totalorder %s23, 1
      %p88 = por %p86, %p87
      %p90 = scmp.ne.s32.totalorder %s75, %s89
      %p91 = scmp.eq.s32.totalorder %s23, 0
      %p92 = por %p90, %p91
      %s94 = sadd.s32 %s93, 1
      %p97 = scmp.eq.s32.totalorder %s17, 1
      %p98 = scmp.ne.s32.totalorder %s93, %s95
      %p99 = scmp.eq.s32.totalorder %s17, 0
      %p100 = por %p98, %p99
      %p101 = scmp.ne.s32.totalorder %s93, %s95
      %p102 = scmp.eq.s32.totalorder %s22, 1
      %p103 = por %p101, %p102
      %p104 = scmp.ne.s32.totalorder %s95, %s96
      %p105 = scmp.eq.s32.totalorder %s22, 0
      %p106 = por %p104, %p105
      %p107 = scmp.ne.s32.totalorder %s95, %s96
      %p108 = scmp.eq.s32.totalorder %s23, 1
      %p109 = por %p107, %p108
      %p111 = scmp.ne.s32.totalorder %s96, %s110
      %p112 = scmp.eq.s32.totalorder %s23, 0
      %p113 = por %p111, %p112
      %s114 = ssub.s32 %s17, %s24
      %p115 = scmp.eq.s32.totalorder %s114, 0
      %s117 = sadd.s32 %s116, 1
      %s118 = scalar_select %p115, %s116, %s117
      %p121 = pneg %p115
      %p122 = scmp.eq.s32.totalorder %s17, 1
      %p123 = por %p121, %p122
      %p124 = scmp.ne.s32.totalorder %s116, %s119
      %p125 = scmp.eq.s32.totalorder %s17, 0
      %p126 = por %p124, %p125
      %p127 = scmp.ne.s32.totalorder %s116, %s119
      %p128 = scmp.eq.s32.totalorder %s22, 1
      %p129 = por %p127, %p128
      %p130 = scmp.ne.s32.totalorder %s119, %s120
      %p131 = scmp.eq.s32.totalorder %s22, 0
      %p132 = por %p130, %p131
      %p133 = scmp.ne.s32.totalorder %s119, %s120
      %p134 = scmp.eq.s32.totalorder %s23, 1
      %p135 = por %p133, %p134
      %p137 = scmp.ne.s32.totalorder %s120, %s136
      %p138 = scmp.eq.s32.totalorder %s23, 0
      %p139 = por %p137, %p138
      %p140 = scmp.le.s32.totalorder 1, %s17
      %p141 = scmp.lt.s32.totalorder %s17, 3
      %p142 = pnand %p140, %p141
      %p143 = pneg %p142
      // Predicated region
      $region9: #{fused_encoder_forward.1} parent=5 // pred_check
        _
      $region10: #{fused_encoder_forward.1} parent=5 // pred_check_branch
        %145 = sbr.rel (%p142) target = $region12
      $region11: #{fused_encoder_forward.1} parent=5 // pred_region
        %s146 = ssub.s32 %s17, 1
        // Predicated region
        $region13: #{fused_encoder_forward.1} parent=11 // pred_check
          %p147 = pneg %p64
        $region14: #{fused_encoder_forward.1} parent=11 // pred_check_branch
          %149 = sbr.rel (%p147) target = $region16
        $region15: #{fused_encoder_forward.1} parent=11 // pred_region
          %s151 = ssub.s32 256, 256
          %152 = vsyncadd [#allocation6], %s151
          %s153 = sshll.u32 [#allocation5], 4
          %s154 = int_to_ptr.vmem [resolvable:$true] %s153
          %159 = dma.hbm_to_vmem [thread:$0]  %s1, 256, %s154, [#allocation6], 128, 128, 8
        $region16: #{fused_encoder_forward.1} parent=11 // pred_fallthru
          _
        // Predicated region
        $region17: #{fused_encoder_forward.1} parent=11 // pred_check
          %p160 = pneg %p85
        $region18: #{fused_encoder_forward.1} parent=11 // pred_check_branch
          %162 = sbr.rel (%p160) target = $region20
        $region19: #{fused_encoder_forward.1} parent=11 // pred_region
          _
        $region20: #{fused_encoder_forward.1} parent=11 // pred_fallthru
          _
        // Predicated region
        $region21: #{fused_encoder_forward.1} parent=11 // pred_check
          %p163 = pneg %p106
        $region22: #{fused_encoder_forward.1} parent=11 // pred_check_branch
          %165 = sbr.rel (%p163) target = $region24
        $region23: #{fused_encoder_forward.1} parent=11 // pred_region
          _
        $region24: #{fused_encoder_forward.1} parent=11 // pred_fallthru
          _
      $region12: #{fused_encoder_forward.1} parent=5 // pred_fallthru
        _
      %p166 = scmp.lt.s32.totalorder %s17, 2
      // Predicated region
      $region25: #{fused_encoder_forward.1} parent=5 // pred_check
        %p167 = pneg %p166
      $region26: #{fused_encoder_forward.1} parent=5 // pred_check_branch
        %169 = sbr.rel (%p167) target = $region28
      $region27: #{fused_encoder_forward.1} parent=5 // pred_region
        // Predicated region
        $region29: #{fused_encoder_forward.1} parent=27 // pred_check
          %p170 = pneg %p37
        $region30: #{fused_encoder_forward.1} parent=27 // pred_check_branch
          %172 = sbr.rel (%p170) target = $region32
        $region31: #{fused_encoder_forward.1} parent=27 // pred_region
          %s173 = sand.u32 %s27, 1
          %s174 = scalar_lea.sflag [#allocation3], %s173
          %s175 = sand.u32 %s27, 1
          %s176 = smul.addr %s175, 8
          %s177 = scalar_lea.vmem [#allocation2], %s176
          %s179 = ssub.s32 128, 128
          %180 = vsyncadd %s174, %s179
          %s181 = smul.addr %s17, 128
          %s182 = scalar_lea.hbm %s0, %s181
          %s184 = sshll.u32 %s177, 4
          %s185 = int_to_ptr.vmem [resolvable:$true] %s184
          %187 = dma.hbm_to_vmem [thread:$0]  %s182, 128, %s185, %s174
        $region32: #{fused_encoder_forward.1} parent=27 // pred_fallthru
          _
      $region28: #{fused_encoder_forward.1} parent=5 // pred_fallthru
        _
      %p188 = scmp.le.s32.totalorder 1, %s17
      %p189 = scmp.lt.s32.totalorder %s17, 3
      %p190 = pnand %p188, %p189
      %p191 = pneg %p190
      // Predicated region
      $region33: #{fused_encoder_forward.1} parent=5 // pred_check
        _
      $region34: #{fused_encoder_forward.1} parent=5 // pred_check_branch
        %193 = sbr.rel (%p190) target = $region36
      $region35: #{fused_encoder_forward.1} parent=5 // pred_region
        %s194 = ssub.s32 %s17, 1
        %s195 = sand.u32 %s30, 1
        %s196 = scalar_lea.sflag [#allocation3], %s195
        %s197 = sand.u32 %s30, 1
        %s198 = smul.addr %s197, 8
        %s199 = scalar_lea.vmem [#allocation2], %s198
        // Predicated region
        $region37: #{fused_encoder_forward.1} parent=35 // pred_check
          %p200 = pneg %p43
        $region38: #{fused_encoder_forward.1} parent=35 // pred_check_branch
          %202 = sbr.rel (%p200) target = $region40
        $region39: #{fused_encoder_forward.1} parent=35 // pred_region
          %203 = dma.done %s196, 128
        $region40: #{fused_encoder_forward.1} parent=35 // pred_fallthru
          _
        // Predicated region
        $region41: #{fused_encoder_forward.1} parent=35 // pred_check
          %p204 = pneg %p64
        $region42: #{fused_encoder_forward.1} parent=35 // pred_check_branch
          %206 = sbr.rel (%p204) target = $region44
        $region43: #{fused_encoder_forward.1} parent=35 // pred_region
          %207 = dma.done [#allocation6], 256
        $region44: #{fused_encoder_forward.1} parent=35 // pred_fallthru
          _
        %s208 = sand.u32 %s30, 1
        %s209 = scalar_lea.sflag [#allocation3], %s208
        %s210 = sand.u32 %s30, 1
        %s211 = smul.addr %s210, 8
        %s212 = scalar_lea.vmem [#allocation2], %s211
        %p213 = pneg %p43
        %p214 = pneg %p40
        %p215 = pneg %p64
        %p216 = pneg %p61
        %p217 = pneg %p85
        %p218 = pneg %p82
        %p219 = pneg %p106
        %p220 = pneg %p103
        %p221 = pneg %p132
        %p222 = pneg %p129
        %s223 = sand.u32 %s119, 1
        %s224 = scalar_lea.sflag [#allocation4], %s223
        %s225 = sand.u32 %s119, 1
        %s226 = smul.addr %s225, 8
        %s227 = scalar_lea.vmem [#allocation7], %s226
        %v228 = vld [vmem:[%s199] sm:$0xff]
        %v229 = vld [vmem:[#allocation5] sm:$0xff]
        %v230 = vld [vmem:[#allocation5 + $0x8] sm:$0xff]
        %v231 = vld [vmem:[%s2] sm:$0x1]
        %v233 = vlaneseq
        %v234 = vshrl.u32 %v233, 7
        %v235 = vsub.s32 0, %v234
        %v236 = vrot.slane %v231, %v235
        %vm238 = vcmask 130048
        %v240 = vsel %vm238, %v228, 0
        %242 = vmatprep.subr.mxu0 0.0
        %243 = vmatpush1.msra.mxu0 %v229
        %244 = vmatprep.subr.mxu0 0.0
        %245 = vmatpush1.msra.mxu0 %v230
        %246 = vmatprep.subr.mxu0 0.0
        %247 = vmatpush1.msra.mxu0 0.0
        %248 = vmatprep.subr.mxu0 0.0
        %249 = vmatpush1.msra.mxu0 0.0
        %250 = vmatprep.subr.mxu0 0.0
        %251 = vmatpush1.msra.mxu0 0.0
        %252 = vmatprep.subr.mxu0 0.0
        %253 = vmatpush1.msra.mxu0 0.0
        %254 = vmatprep.subr.mxu0 0.0
        %255 = vmatpush1.msra.mxu0 0.0
        %256 = vmatprep.subr.mxu0 0.0
        %257 = vmatpush1.msra.mxu0 0.0
        %258 = vmatprep.subr.mxu0 0.0
        %259 = vmatpush1.msra.mxu0 0.0
        %260 = vmatprep.subr.mxu0 0.0
        %261 = vmatpush1.msra.mxu0 0.0
        %262 = vmatprep.subr.mxu0 0.0
        %263 = vmatpush1.msra.mxu0 0.0
        %264 = vmatprep.subr.mxu0 0.0
        %265 = vmatpush1.msra.mxu0 0.0
        %266 = vmatprep.subr.mxu0 0.0
        %267 = vmatpush1.msra.mxu0 0.0
        %268 = vmatprep.subr.mxu0 0.0
        %269 = vmatpush1.msra.mxu0 0.0
        %270 = vmatprep.subr.mxu0 0.0
        %271 = vmatpush1.msra.mxu0 0.0
        %272 = vmatprep.subr.mxu0 0.0
        %273 = vmatpush1.msra.mxu0 0.0
        %274 = vmatprep.subr.mxu0 0.0
        %275 = vmatpush1.msra.mxu0 0.0
        %276 = vmatprep.subr.mxu0 0.0
        %277 = vmatpush1.msra.mxu0 0.0
        %278 = vmatprep.subr.mxu0 0.0
        %279 = vmatpush1.msra.mxu0 0.0
        %280 = vmatprep.subr.mxu0 0.0
        %281 = vmatpush1.msra.mxu0 0.0
        %282 = vmatprep.subr.mxu0 0.0
        %283 = vmatpush1.msra.mxu0 0.0
        %284 = vmatprep.subr.mxu0 0.0
        %285 = vmatpush1.msra.mxu0 0.0
        %286 = vmatprep.subr.mxu0 0.0
        %287 = vmatpush1.msra.mxu0 0.0
        %288 = vmatprep.subr.mxu0 0.0
        %289 = vmatpush1.msra.mxu0 0.0
        %290 = vmatprep.subr.mxu0 0.0
        %291 = vmatpush1.msra.mxu0 0.0
        %292 = vmatprep.subr.mxu0 0.0
        %293 = vmatpush1.msra.mxu0 0.0
        %294 = vmatprep.subr.mxu0 0.0
        %295 = vmatpush1.msra.mxu0 0.0
        %296 = vmatprep.subr.mxu0 0.0
        %297 = vmatpush1.msra.mxu0 0.0
        %298 = vmatprep.subr.mxu0 0.0
        %299 = vmatpush1.msra.mxu0 0.0
        %300 = vmatprep.subr.mxu0 0.0
        %301 = vmatpush1.msra.mxu0 0.0
        %302 = vmatprep.subr.mxu0 0.0
        %303 = vmatpush1.msra.mxu0 0.0
        %304 = vmatprep.subr.mxu0 0.0
        %305 = vmatpush1.msra.mxu0 0.0
        %306 = vmatprep.mubr.f32.mxu0 0.0
        %307 = vmatmul.mubr.f32.gmra.mrb[0].mxu0 %v240
        %v308 = vpop.f32.mrb[0].mxu0
        %v309 = vadd.f32 %v236, %v308
        %v310 = vpop.f32.mrb[0].mxu0
        %311 = vdwg.mxu0
        %v312 = vld [vmem:[%s3] sm:$0x1]
        %v314 = vlaneseq
        %v315 = vshrl.u32 %v314, 7
        %v316 = vsub.s32 0, %v315
        %v317 = vrot.slane %v312, %v316
        %vm319 = vcmp.gt.f32.partialorder %v309, 0.0
        %v320 = vmul.f32 %v317, %v309
        %v321 = vsel %vm319, %v309, %v320
        %vm322 = vcmp.gt.f32.partialorder %v321, 0.0
        %v323 = vmul.f32 %v317, %v321
        %v324 = vsel %vm322, %v321, %v323
        %vm325 = vcmask 261120
        %326 = vst.msk [vmem:[%s227] sm:$0xff] %vm325, %v324
        %s327 = sand.u32 %s119, 1
        %s328 = scalar_lea.sflag [#allocation4], %s327
        %s329 = sand.u32 %s119, 1
        %s330 = smul.addr %s329, 8
        %s331 = scalar_lea.vmem [#allocation7], %s330
        // Predicated region
        $region45: #{fused_encoder_forward.1} parent=35 // pred_check
          %p332 = pneg %p129
        $region46: #{fused_encoder_forward.1} parent=35 // pred_check_branch
          %334 = sbr.rel (%p332) target = $region48
        $region47: #{fused_encoder_forward.1} parent=35 // pred_region
          %s336 = ssub.s32 128, 128
          %337 = vsyncadd %s328, %s336
          %s338 = smul.addr %s22, 128
          %s339 = scalar_lea.hbm %s4, %s338
          %s341 = sshll.u32 %s331, 4
          %s342 = int_to_ptr.vmem [resolvable:$true] %s341
          %344 = dma.vmem_to_hbm [thread:$0]  %s342, 128, %s339, %s328
        $region48: #{fused_encoder_forward.1} parent=35 // pred_fallthru
          _
      $region36: #{fused_encoder_forward.1} parent=5 // pred_fallthru
        _
      %p345 = scmp.le.s32.totalorder 2, %s17
      // Predicated region
      $region49: #{fused_encoder_forward.1} parent=5 // pred_check
        %p346 = pneg %p345
      $region50: #{fused_encoder_forward.1} parent=5 // pred_check_branch
        %348 = sbr.rel (%p346) target = $region52
      $region51: #{fused_encoder_forward.1} parent=5 // pred_region
        %s349 = ssub.s32 %s17, 2
        // Predicated region
        $region53: #{fused_encoder_forward.1} parent=51 // pred_check
          %p350 = pneg %p135
        $region54: #{fused_encoder_forward.1} parent=51 // pred_check_branch
          %352 = sbr.rel (%p350) target = $region56
        $region55: #{fused_encoder_forward.1} parent=51 // pred_region
          %s353 = sand.u32 %s120, 1
          %s354 = scalar_lea.sflag [#allocation4], %s353
          %s355 = sand.u32 %s120, 1
          %s356 = smul.addr %s355, 8
          %s357 = scalar_lea.vmem [#allocation7], %s356
          %358 = dma.done %s354, 128
        $region56: #{fused_encoder_forward.1} parent=51 // pred_fallthru
          _
      $region52: #{fused_encoder_forward.1} parent=5 // pred_fallthru
        _
    $region6: #{fused_encoder_forward.1} parent=1 // loop_footer
      %s21 = sadd.s32 1, %s17
    $region7: #{fused_encoder_forward.1} parent=1 // loop_footer_branch
      %16 = sbr.rel target = $region3
    $region8: #{fused_encoder_forward.1} parent=1 // loop_exit
      _
    %359 = vsyncpa [#allocation3], 1
    %s360 = scalar_lea.sflag [#allocation3], 1
    %361 = vsyncpa %s360, 1
    %362 = vsyncpa [#allocation6], 1
    %363 = vsyncpa [#allocation4], 1
    %s364 = scalar_lea.sflag [#allocation4], 1
    %365 = vsyncpa %s364, 1

</llo_original>
